<compile_context>
chip_gen: v7x
topology: tpu7x:2x2x1
jax: 0.10.0
libtpu: 0.0.40
codegen_flags: <defaults>
</compile_context>

<pallas_src>
import functools

import jax
import jax.numpy as jnp
from jax.experimental import pallas as pl
from jax.experimental.pallas import tpu as pltpu


# ----------------------------------------------------------------------------
# Kernel (one grid step = one batch tile; weights resident in VMEM)
# ----------------------------------------------------------------------------
def _it_ffn_kernel(
    img_ref,      # (TB, V, D)  img tile
    ctx_ref,      # (TB, T)     context tile
    wt1_ref,      # (T, H)      aux_tabular layer 1 (weight-norm'd, transposed)
    bt1_ref,      # (1, H)
    wt2_ref,      # (H, D)      aux_tabular layer 2
    bt2_ref,      # (1, D)
    wa1_img_ref,  # (D, H)      aux layer 1, rows that multiply `squeeze`
    wa1_tab_ref,  # (D, H)      aux layer 1, rows that multiply `tabular_feat`
    ba1_ref,      # (1, H)
    wa2_ref,      # (H, 2V)     aux layer 2, packed [scale | shift] heads
    ba2_ref,      # (1, 2V)
    out_ref,      # (TB, V, D)
):
    n_vec = img_ref.shape[1]

    # 1) Global average pool over the sequence axis; accumulate in f32
    #    (img may be bf16).  img is re-read later for the blend; we do not keep
    #    a materialized f32 copy live across the GEMMs.
    squeeze = jnp.sum(img_ref[...].astype(jnp.float32), axis=1) * (1.0 / n_vec)  # (TB, D)

    # 2) Tabular branch: relu(ctx @ Wt1 + b) @ Wt2 + b -> (TB, D).
    ctx = ctx_ref[...].astype(jnp.float32)
    h1 = jnp.dot(ctx, wt1_ref[...], preferred_element_type=jnp.float32) + bt1_ref[...]
    h1 = jnp.maximum(h1, 0.0)
    tab = jnp.dot(h1, wt2_ref[...], preferred_element_type=jnp.float32) + bt2_ref[...]

    # 3) Gating branch on cat([squeeze, tab]) — concat folded into two GEMMs.
    h2 = (
        jnp.dot(squeeze, wa1_img_ref[...], preferred_element_type=jnp.float32)
        + jnp.dot(tab, wa1_tab_ref[...], preferred_element_type=jnp.float32)
        + ba1_ref[...]
    )
    h2 = jnp.maximum(h2, 0.0)

    # Single packed output head (H, 2V) -> static slice into scale / shift.
    att = jnp.dot(h2, wa2_ref[...], preferred_element_type=jnp.float32) + ba2_ref[...]  # (TB, 2V)
    v_scale = jax.nn.sigmoid(att[:, :n_vec])[:, :, None]   # (TB, V, 1)  EUP
    v_shift = att[:, n_vec:][:, :, None]                   # (TB, V, 1)
    tab_row = tab[:, None, :]                               # (TB, 1, D)
    base = tab_row + v_shift                                # (TB, V, D)

    # 4) FMA-form blend (== v_scale*img + (1-v_scale)*tab + v_shift), streaming
    #    img straight from the tile (inline cast), f32 math, cast at store.
    img = img_ref[...].astype(jnp.float32)
    out_ref[...] = (v_scale * (img - tab_row) + base).astype(out_ref.dtype)


# ----------------------------------------------------------------------------
# Wrapper
# ----------------------------------------------------------------------------
def _choose_batch_tile(batch, n_vec, dim, itemsize, budget_bytes=24 * 1024 * 1024):
    """Pick a batch tile so 2x double-buffered (img + out) tiles fit `budget_bytes`
    (sized for v7x's 64 MiB VMEM; v5e/v6e have more headroom)."""
    per_row = n_vec * dim * itemsize
    cap = max(1, budget_bytes // (4 * per_row))
    if cap >= batch:
        return batch
    if cap >= 256:
        cap = (cap // 256) * 256        # MXU-friendly M on v6e/v7x
    else:
        cap = max(8, (cap // 8) * 8)    # keep block shapes (8,128)-friendly
    return min(batch, cap)


@functools.partial(jax.jit, static_argnames=("batch_tile", "vmem_limit_bytes"))
def it_feedforward_forward(img, context, params, *, batch_tile=None,
                           vmem_limit_bytes=48 * 1024 * 1024):
    """Fused Pallas forward of IT_FeedForward.

    img:     (B, num_vectors, img_dim)   f32 or bf16 (output matches img dtype)
    context: (B, tabular_dim)
    params:  tuple of 9 pre-processed weight/bias arrays (see _it_ffn_kernel).
    """
    B, V, D = img.shape
    T = context.shape[1]

    tb = batch_tile if batch_tile is not None else _choose_batch_tile(
        B, V, D, jnp.dtype(img.dtype).itemsize)
    grid = (pl.cdiv(B, tb),)

    def batched(shape):
        # Batch-tiled block: advances along the grid axis.
        return pl.BlockSpec(shape, lambda i: (i,) + (0,) * (len(shape) - 1))

    def resident(arr):
        # Whole-array block with constant block index: DMA'd once, stays in VMEM.
        return pl.BlockSpec(arr.shape, lambda i, _nd=arr.ndim: (0,) * _nd)

    in_specs = [batched((tb, V, D)), batched((tb, T))] + [resident(p) for p in params]
    out_specs = batched((tb, V, D))

    return pl.pallas_call(
        _it_ffn_kernel,
        out_shape=jax.ShapeDtypeStruct((B, V, D), img.dtype),
        grid=grid,
        in_specs=in_specs,
        out_specs=out_specs,
        compiler_params=pltpu.CompilerParams(
            dimension_semantics=("parallel",),   # use both TCs on v7x
            vmem_limit_bytes=vmem_limit_bytes,
        ),
    )(img, context, *params)


# ----------------------------------------------------------------------------
# Parameter construction (weight_norm handled as one-time prep, not hot path)
# ----------------------------------------------------------------------------
def _weight_norm_linear(key, in_dim, out_dim):
    """Returns (W_eff^T of shape (in, out), bias of shape (out,)) with PyTorch
    weight_norm semantics: W_eff = g * v / ||v||_row."""
    kv, kg, kb = jax.random.split(key, 3)
    v = jax.random.normal(kv, (out_dim, in_dim), jnp.float32) * 0.05
    g = 1.0 + 0.1 * jax.random.normal(kg, (out_dim,), jnp.float32)
    b = 0.05 * jax.random.normal(kb, (out_dim,), jnp.float32)
    row_norm = jnp.sqrt(jnp.sum(v * v, axis=1, keepdims=True))
    w_eff = v * (g[:, None] / row_norm)             # (out, in), PyTorch layout
    return w_eff.T, b                               # (in, out) for x @ W


def make_params(key, img_dim, tabular_dim, hidden_dim, num_vectors):
    # TODO(synk): in production, pad tabular_dim and 2*num_vectors to multiples
    # of 128 for fully lane-dense GEMMs (demo shapes are small / partially masked).
    k1, k2, k3, k4 = jax.random.split(key, 4)
    wt1, bt1 = _weight_norm_linear(k1, tabular_dim, hidden_dim)      # tabular L1
    wt2, bt2 = _weight_norm_linear(k2, hidden_dim, img_dim)          # tabular L2
    wa1, ba1 = _weight_norm_linear(k3, 2 * img_dim, hidden_dim)      # aux L1
    wa2, ba2 = _weight_norm_linear(k4, hidden_dim, 2 * num_vectors)  # aux L2 (packed)

    # Fold the concat into two GEMMs: rows [0:D] act on `squeeze`, [D:2D] on tab.
    wa1_img, wa1_tab = wa1[:img_dim], wa1[img_dim:]

    def row(x):  # biases as lane-oriented (1, X) rows
        return x.reshape(1, -1)

    return (wt1, row(bt1), wt2, row(bt2),
            wa1_img, wa1_tab, row(ba1),
            wa2, row(ba2))


# ----------------------------------------------------------------------------
# Pure-JAX reference (mirrors the PyTorch forward)
# ----------------------------------------------------------------------------
def it_feedforward_ref(img, context, params):
    (wt1, bt1, wt2, bt2, wa1_img, wa1_tab, ba1, wa2, ba2) = params
    V = img.shape[1]
    img32 = img.astype(jnp.float32)
    ctx32 = context.astype(jnp.float32)
    squeeze = jnp.mean(img32, axis=1)                                  # (B, D)
    h1 = jax.nn.relu(ctx32 @ wt1 + bt1)
    tab = h1 @ wt2 + bt2                                               # (B, D)
    h2 = jax.nn.relu(squeeze @ wa1_img + tab @ wa1_tab + ba1)
    att = h2 @ wa2 + ba2                                               # (B, 2V)
    v_scale = jax.nn.sigmoid(att[:, :V])[:, :, None]                   # (B, V, 1)
    v_shift = att[:, V:][:, :, None]                                   # (B, V, 1)
    return v_scale * img32 + (1.0 - v_scale) * tab[:, None, :] + v_shift


# ----------------------------------------------------------------------------
if __name__ == "__main__":
    # Small, deterministic example shapes implied by the forward:
    #   img:     (B, num_vectors, img_dim)
    #   context: (B, tabular_dim)
    B, num_vectors, img_dim = 2, 8, 128        # lane-dense last dim
    tabular_dim, hidden_dim = 32, 128

    key = jax.random.PRNGKey(0)
    k_img, k_ctx, k_par = jax.random.split(key, 3)
    img_f32 = jax.random.normal(k_img, (B, num_vectors, img_dim), dtype=jnp.float32)
    context = jax.random.normal(k_ctx, (B, tabular_dim), dtype=jnp.float32)
    params = make_params(k_par, img_dim, tabular_dim, hidden_dim, num_vectors)

    # ---- f32 I/O path -------------------------------------------------------
    out = jax.block_until_ready(it_feedforward_forward(img_f32, context, params))
    ref = it_feedforward_ref(img_f32, context, params)
    assert out.shape == (B, num_vectors, img_dim)
    assert out.dtype == jnp.float32
    assert jnp.allclose(out, ref, rtol=2e-3, atol=2e-3), (
        f"f32 max abs err = {jnp.max(jnp.abs(out - ref))}"
    )

    # ---- bf16 I/O path (f32 math inside the kernel) -------------------------
    img_bf16 = img_f32.astype(jnp.bfloat16)
    out_bf = jax.block_until_ready(it_feedforward_forward(img_bf16, context, params))
    ref_bf = it_feedforward_ref(img_bf16, context, params)
    assert out_bf.shape == (B, num_vectors, img_dim)
    assert out_bf.dtype == jnp.bfloat16
    bf_err = jnp.max(jnp.abs(out_bf.astype(jnp.float32) - ref_bf))
    assert bf_err < 3e-2, f"bf16 max abs err = {bf_err}"

    print("KERNEL_OK")
</pallas_src>

<mosaic_0001>
module attributes {stable_mosaic.version = 11 : i64} {
  func.func @_it_ffn_kernel(%arg0: i32, %arg1: memref<2x8x128xf32, #tpu.memory_space<vmem>>, %arg2: memref<2x32xf32, #tpu.memory_space<vmem>>, %arg3: memref<32x128xf32, #tpu.memory_space<vmem>>, %arg4: memref<1x128xf32, #tpu.memory_space<vmem>>, %arg5: memref<128x128xf32, #tpu.memory_space<vmem>>, %arg6: memref<1x128xf32, #tpu.memory_space<vmem>>, %arg7: memref<128x128xf32, #tpu.memory_space<vmem>>, %arg8: memref<128x128xf32, #tpu.memory_space<vmem>>, %arg9: memref<1x128xf32, #tpu.memory_space<vmem>>, %arg10: memref<128x16xf32, #tpu.memory_space<vmem>>, %arg11: memref<1x16xf32, #tpu.memory_space<vmem>>, %arg12: memref<2x8x128xf32, #tpu.memory_space<vmem>>) attributes {dimension_semantics = [#tpu.dimension_semantics<parallel>], iteration_bounds = array<i64: 1>, scalar_prefetch = 0 : i64, scratch_operands = 0 : i64, tpu.core_type = #tpu.core_type<tc>, window_params = [{transform_indices = @transform_0, window_bounds = array<i64: 2, 8, 128>}, {transform_indices = @transform_1, window_bounds = array<i64: 2, 32>}, {pipeline_mode = #tpu.pipeline_mode<synchronous>, transform_indices = @transform_2, window_bounds = array<i64: 32, 128>}, {pipeline_mode = #tpu.pipeline_mode<synchronous>, transform_indices = @transform_3, window_bounds = array<i64: 1, 128>}, {pipeline_mode = #tpu.pipeline_mode<synchronous>, transform_indices = @transform_4, window_bounds = array<i64: 128, 128>}, {pipeline_mode = #tpu.pipeline_mode<synchronous>, transform_indices = @transform_5, window_bounds = array<i64: 1, 128>}, {pipeline_mode = #tpu.pipeline_mode<synchronous>, transform_indices = @transform_6, window_bounds = array<i64: 128, 128>}, {pipeline_mode = #tpu.pipeline_mode<synchronous>, transform_indices = @transform_7, window_bounds = array<i64: 128, 128>}, {pipeline_mode = #tpu.pipeline_mode<synchronous>, transform_indices = @transform_8, window_bounds = array<i64: 1, 128>}, {pipeline_mode = #tpu.pipeline_mode<synchronous>, transform_indices = @transform_9, window_bounds = array<i64: 128, 16>}, {pipeline_mode = #tpu.pipeline_mode<synchronous>, transform_indices = @transform_10, window_bounds = array<i64: 1, 16>}, {transform_indices = @transform_11, window_bounds = array<i64: 2, 8, 128>}]} {
    %c0 = arith.constant 0 : index
    %c0_0 = arith.constant 0 : index
    %c0_1 = arith.constant 0 : index
    %0 = vector.load %arg1[%c0, %c0_0, %c0_1] : memref<2x8x128xf32, #tpu.memory_space<vmem>>, vector<2x8x128xf32>
    %cst = arith.constant dense<0.000000e+00> : vector<2x128xf32>
    %1 = vector.multi_reduction <add>, %0, %cst [1] : vector<2x8x128xf32> to vector<2x128xf32>
    %cst_2 = arith.constant 1.250000e-01 : f32
    %2 = vector.broadcast %cst_2 : f32 to vector<2x128xf32>
    %3 = arith.mulf %1, %2 : vector<2x128xf32>
    %c0_3 = arith.constant 0 : index
    %c0_4 = arith.constant 0 : index
    %4 = vector.load %arg2[%c0_3, %c0_4] : memref<2x32xf32, #tpu.memory_space<vmem>>, vector<2x32xf32>
    %c0_5 = arith.constant 0 : index
    %c0_6 = arith.constant 0 : index
    %5 = vector.load %arg3[%c0_5, %c0_6] : memref<32x128xf32, #tpu.memory_space<vmem>>, vector<32x128xf32>
    %cst_7 = arith.constant dense<0.000000e+00> : vector<2x128xf32>
    %6 = tpu.matmul %4, %5, %cst_7 {dimension_numbers = #tpu.dot_dimension_numbers<[1], [0], [0], [1], [0, 0, 1, 1], [], []>} : vector<2x32xf32>, vector<32x128xf32>, vector<2x128xf32> -> vector<2x128xf32>
    %c0_8 = arith.constant 0 : index
    %c0_9 = arith.constant 0 : index
    %7 = vector.load %arg4[%c0_8, %c0_9] : memref<1x128xf32, #tpu.memory_space<vmem>>, vector<1x128xf32>
    %8 = vector.broadcast %7 : vector<1x128xf32> to vector<2x128xf32>
    %9 = arith.addf %6, %8 : vector<2x128xf32>
    %cst_10 = arith.constant 0.000000e+00 : f32
    %10 = vector.broadcast %cst_10 : f32 to vector<2x128xf32>
    %11 = arith.maximumf %9, %10 : vector<2x128xf32>
    %c0_11 = arith.constant 0 : index
    %c0_12 = arith.constant 0 : index
    %12 = vector.load %arg5[%c0_11, %c0_12] : memref<128x128xf32, #tpu.memory_space<vmem>>, vector<128x128xf32>
    %cst_13 = arith.constant dense<0.000000e+00> : vector<2x128xf32>
    %13 = tpu.matmul %11, %12, %cst_13 {dimension_numbers = #tpu.dot_dimension_numbers<[1], [0], [0], [1], [0, 0, 1, 1], [], []>} : vector<2x128xf32>, vector<128x128xf32>, vector<2x128xf32> -> vector<2x128xf32>
    %c0_14 = arith.constant 0 : index
    %c0_15 = arith.constant 0 : index
    %14 = vector.load %arg6[%c0_14, %c0_15] : memref<1x128xf32, #tpu.memory_space<vmem>>, vector<1x128xf32>
    %15 = vector.broadcast %14 : vector<1x128xf32> to vector<2x128xf32>
    %16 = arith.addf %13, %15 : vector<2x128xf32>
    %c0_16 = arith.constant 0 : index
    %c0_17 = arith.constant 0 : index
    %17 = vector.load %arg7[%c0_16, %c0_17] : memref<128x128xf32, #tpu.memory_space<vmem>>, vector<128x128xf32>
    %cst_18 = arith.constant dense<0.000000e+00> : vector<2x128xf32>
    %18 = tpu.matmul %3, %17, %cst_18 {dimension_numbers = #tpu.dot_dimension_numbers<[1], [0], [0], [1], [0, 0, 1, 1], [], []>} : vector<2x128xf32>, vector<128x128xf32>, vector<2x128xf32> -> vector<2x128xf32>
    %c0_19 = arith.constant 0 : index
    %c0_20 = arith.constant 0 : index
    %19 = vector.load %arg8[%c0_19, %c0_20] : memref<128x128xf32, #tpu.memory_space<vmem>>, vector<128x128xf32>
    %cst_21 = arith.constant dense<0.000000e+00> : vector<2x128xf32>
    %20 = tpu.matmul %16, %19, %cst_21 {dimension_numbers = #tpu.dot_dimension_numbers<[1], [0], [0], [1], [0, 0, 1, 1], [], []>} : vector<2x128xf32>, vector<128x128xf32>, vector<2x128xf32> -> vector<2x128xf32>
    %21 = arith.addf %18, %20 : vector<2x128xf32>
    %c0_22 = arith.constant 0 : index
    %c0_23 = arith.constant 0 : index
    %22 = vector.load %arg9[%c0_22, %c0_23] : memref<1x128xf32, #tpu.memory_space<vmem>>, vector<1x128xf32>
    %23 = vector.broadcast %22 : vector<1x128xf32> to vector<2x128xf32>
    %24 = arith.addf %21, %23 : vector<2x128xf32>
    %cst_24 = arith.constant 0.000000e+00 : f32
    %25 = vector.broadcast %cst_24 : f32 to vector<2x128xf32>
    %26 = arith.maximumf %24, %25 : vector<2x128xf32>
    %c0_25 = arith.constant 0 : index
    %c0_26 = arith.constant 0 : index
    %27 = vector.load %arg10[%c0_25, %c0_26] : memref<128x16xf32, #tpu.memory_space<vmem>>, vector<128x16xf32>
    %cst_27 = arith.constant dense<0.000000e+00> : vector<2x16xf32>
    %28 = tpu.matmul %26, %27, %cst_27 {dimension_numbers = #tpu.dot_dimension_numbers<[1], [0], [0], [1], [0, 0, 1, 1], [], []>} : vector<2x128xf32>, vector<128x16xf32>, vector<2x16xf32> -> vector<2x16xf32>
    %c0_28 = arith.constant 0 : index
    %c0_29 = arith.constant 0 : index
    %29 = vector.load %arg11[%c0_28, %c0_29] : memref<1x16xf32, #tpu.memory_space<vmem>>, vector<1x16xf32>
    %30 = vector.broadcast %29 : vector<1x16xf32> to vector<2x16xf32>
    %31 = arith.addf %28, %30 : vector<2x16xf32>
    %32 = vector.extract_strided_slice %31 {offsets = [0, 0], sizes = [2, 8], strides = [1, 1]} : vector<2x16xf32> to vector<2x8xf32>
    %33 = arith.negf %32 : vector<2x8xf32>
    %34 = math.exp %33 : vector<2x8xf32>
    %cst_30 = arith.constant 1.000000e+00 : f32
    %35 = vector.broadcast %cst_30 : f32 to vector<2x8xf32>
    %36 = arith.addf %35, %34 : vector<2x8xf32>
    %37 = arith.divf %35, %36 : vector<2x8xf32>
    %38 = vector.shape_cast %37 : vector<2x8xf32> to vector<2x8x1xf32>
    %39 = vector.extract_strided_slice %31 {offsets = [0, 8], sizes = [2, 8], strides = [1, 1]} : vector<2x16xf32> to vector<2x8xf32>
    %40 = vector.shape_cast %39 : vector<2x8xf32> to vector<2x8x1xf32>
    %41 = vector.shape_cast %16 : vector<2x128xf32> to vector<2x1x128xf32>
    %42 = vector.broadcast %41 : vector<2x1x128xf32> to vector<2x8x128xf32>
    %43 = vector.broadcast %40 : vector<2x8x1xf32> to vector<2x8x128xf32>
    %44 = arith.addf %42, %43 : vector<2x8x128xf32>
    %c0_31 = arith.constant 0 : index
    %c0_32 = arith.constant 0 : index
    %c0_33 = arith.constant 0 : index
    %45 = vector.load %arg1[%c0_31, %c0_32, %c0_33] : memref<2x8x128xf32, #tpu.memory_space<vmem>>, vector<2x8x128xf32>
    %46 = vector.broadcast %41 : vector<2x1x128xf32> to vector<2x8x128xf32>
    %47 = arith.subf %45, %46 : vector<2x8x128xf32>
    %48 = vector.broadcast %38 : vector<2x8x1xf32> to vector<2x8x128xf32>
    %49 = arith.mulf %48, %47 : vector<2x8x128xf32>
    %50 = arith.addf %49, %44 : vector<2x8x128xf32>
    %c0_34 = arith.constant 0 : index
    %c0_35 = arith.constant 0 : index
    %c0_36 = arith.constant 0 : index
    %51 = vector.load %arg12[%c0_34, %c0_35, %c0_36] : memref<2x8x128xf32, #tpu.memory_space<vmem>>, vector<2x8x128xf32>
    tpu.vector_store %arg12[%c0_34, %c0_35, %c0_36], %50 {strides = array<i32>} : memref<2x8x128xf32, #tpu.memory_space<vmem>>, vector<2x8x128xf32>,
    return
  }
  func.func @transform_0(%arg0: i32) -> (i32, i32, i32) {
    %c0_i32 = arith.constant 0 : i32
    %c0_i32_0 = arith.constant 0 : i32
    %c0_i32_1 = arith.constant 0 : i32
    return %arg0, %c0_i32, %c0_i32_0 : i32, i32, i32
  }
  func.func @transform_1(%arg0: i32) -> (i32, i32) {
    %c0_i32 = arith.constant 0 : i32
    %c0_i32_0 = arith.constant 0 : i32
    return %arg0, %c0_i32 : i32, i32
  }
  func.func @transform_2(%arg0: i32) -> (i32, i32) {
    %c0_i32 = arith.constant 0 : i32
    %c0_i32_0 = arith.constant 0 : i32
    %c0_i32_1 = arith.constant 0 : i32
    return %c0_i32, %c0_i32_0 : i32, i32
  }
  func.func @transform_3(%arg0: i32) -> (i32, i32) {
    %c0_i32 = arith.constant 0 : i32
    %c0_i32_0 = arith.constant 0 : i32
    %c0_i32_1 = arith.constant 0 : i32
    return %c0_i32, %c0_i32_0 : i32, i32
  }
  func.func @transform_4(%arg0: i32) -> (i32, i32) {
    %c0_i32 = arith.constant 0 : i32
    %c0_i32_0 = arith.constant 0 : i32
    %c0_i32_1 = arith.constant 0 : i32
    return %c0_i32, %c0_i32_0 : i32, i32
  }
  func.func @transform_5(%arg0: i32) -> (i32, i32) {
    %c0_i32 = arith.constant 0 : i32
    %c0_i32_0 = arith.constant 0 : i32
    %c0_i32_1 = arith.constant 0 : i32
    return %c0_i32, %c0_i32_0 : i32, i32
  }
  func.func @transform_6(%arg0: i32) -> (i32, i32) {
    %c0_i32 = arith.constant 0 : i32
    %c0_i32_0 = arith.constant 0 : i32
    %c0_i32_1 = arith.constant 0 : i32
    return %c0_i32, %c0_i32_0 : i32, i32
  }
  func.func @transform_7(%arg0: i32) -> (i32, i32) {
    %c0_i32 = arith.constant 0 : i32
    %c0_i32_0 = arith.constant 0 : i32
    %c0_i32_1 = arith.constant 0 : i32
    return %c0_i32, %c0_i32_0 : i32, i32
  }
  func.func @transform_8(%arg0: i32) -> (i32, i32) {
    %c0_i32 = arith.constant 0 : i32
    %c0_i32_0 = arith.constant 0 : i32
    %c0_i32_1 = arith.constant 0 : i32
    return %c0_i32, %c0_i32_0 : i32, i32
  }
  func.func @transform_9(%arg0: i32) -> (i32, i32) {
    %c0_i32 = arith.constant 0 : i32
    %c0_i32_0 = arith.constant 0 : i32
    %c0_i32_1 = arith.constant 0 : i32
    return %c0_i32, %c0_i32_0 : i32, i32
  }
  func.func @transform_10(%arg0: i32) -> (i32, i32) {
    %c0_i32 = arith.constant 0 : i32
    %c0_i32_0 = arith.constant 0 : i32
    %c0_i32_1 = arith.constant 0 : i32
    return %c0_i32, %c0_i32_0 : i32, i32
  }
  func.func @transform_11(%arg0: i32) -> (i32, i32, i32) {
    %c0_i32 = arith.constant 0 : i32
    %c0_i32_0 = arith.constant 0 : i32
    %c0_i32_1 = arith.constant 0 : i32
    return %arg0, %c0_i32, %c0_i32_0 : i32, i32, i32
  }
}

</mosaic_0001>

<llo_original>
// kernel: it_feedforward_forward.1
$region0: #{it_feedforward_forward.1}
  #allocation0 [shape = 'u32[]', space=smem, size = 0x4, offset = 0x4, fixed_abs, tag = 'smem constant byte address 0x4 - core index']
  #allocation1 [shape = 'u32[144,128]{1,0:T(1,128)}', space=vmem, size = 0x12000, scoped, tag = 'internal scratch']
  %s0 = inlined_call_operand.vmem [shape: f32[2,8,128], index: 0, kind: input, shape index: {}]
  %s1 = inlined_call_operand.vmem [shape: f32[2,32], index: 1, kind: input, shape index: {}]
  %s2 = inlined_call_operand.hbm [shape: f32[32,128], index: 2, kind: input, shape index: {}]
  %s3 = inlined_call_operand.vmem [shape: f32[1,128], index: 3, kind: input, shape index: {}]
  %s4 = inlined_call_operand.vmem [shape: f32[128,128], index: 4, kind: input, shape index: {}]
  %s5 = inlined_call_operand.vmem [shape: f32[1,128], index: 5, kind: input, shape index: {}]
  %s6 = inlined_call_operand.hbm [shape: f32[128,128], index: 6, kind: input, shape index: {}]
  %s7 = inlined_call_operand.hbm [shape: f32[128,128], index: 7, kind: input, shape index: {}]
  %s8 = inlined_call_operand.vmem [shape: f32[1,128], index: 8, kind: input, shape index: {}]
  %s9 = inlined_call_operand.vmem [shape: f32[128,16], index: 9, kind: input, shape index: {}]
  %s10 = inlined_call_operand.vmem [shape: f32[1,16], index: 10, kind: input, shape index: {}]
  %s11 = inlined_call_operand.hbm [shape: f32[2,8,128], index: 11, kind: output, shape index: {}]
  %s12 = sld [smem:[#allocation0]]
  $region66: #{it_feedforward_forward.1} parent=0
    _
  %s14 = ssub.s32 1, %s12
  %s15 = scalar_select 0, %s14, %s12
  $region1: #{it_feedforward_forward.1} parent=0
    #allocation2 [shape = 'u8[16384]{0}', space=vmem, size = 0x4000, scoped, tag = 'input window, operand 2, single buffered']
    #allocation3 [shape = 's32[1]{0}', space=sflag, size = 0x4, scoped, tag = 'scoped memory for it_feedforward_forward.1']
    #allocation4 [shape = 's32[1]{0}', space=sflag, size = 0x4, scoped, tag = 'scoped memory for it_feedforward_forward.1']
    #allocation5 [shape = 'u8[65536]{0}', space=vmem, size = 0x10000, scoped, tag = 'input window, operand 6, single buffered']
    #allocation6 [shape = 's32[1]{0}', space=sflag, size = 0x4, scoped, tag = 'scoped memory for it_feedforward_forward.1']
    #allocation7 [shape = 'u8[65536]{0}', space=vmem, size = 0x10000, scoped, tag = 'input window, operand 7, single buffered']
    #allocation8 [shape = 'u8[8192]{0}', space=vmem, size = 0x2000, scoped, tag = 'output window, operand 0, single buffered']
    %16 = vsyncpa [#allocation3], 0
    %17 = vsyncpa [#allocation6], 0
    %18 = vsyncpa [#allocation4], 0
    // Predicated region
    $region2: #{it_feedforward_forward.1} parent=1 // pred_check
      _
    $region3: #{it_feedforward_forward.1} parent=1 // pred_check_branch
      %20 = sbr.rel (0) target = $region5
    $region4: #{it_feedforward_forward.1} parent=1 // pred_region
      _
    $region5: #{it_feedforward_forward.1} parent=1 // pred_fallthru
      _
    // Predicated region
    $region6: #{it_feedforward_forward.1} parent=1 // pred_check
      _
    $region7: #{it_feedforward_forward.1} parent=1 // pred_check_branch
      %22 = sbr.rel (0) target = $region9
    $region8: #{it_feedforward_forward.1} parent=1 // pred_region
      _
    $region9: #{it_feedforward_forward.1} parent=1 // pred_fallthru
      _
    // Predicated region
    $region10: #{it_feedforward_forward.1} parent=1 // pred_check
      _
    $region11: #{it_feedforward_forward.1} parent=1 // pred_check_branch
      %24 = sbr.rel (0) target = $region13
    $region12: #{it_feedforward_forward.1} parent=1 // pred_region
      %s26 = ssub.s32 512, 512
      %27 = vsyncadd [#allocation3], %s26
      %s28 = sshll.u32 [#allocation2], 4
      %s29 = int_to_ptr.vmem [resolvable:$true] %s28
      %34 = dma.hbm_to_vmem [thread:$0]  %s2, 512, %s29, [#allocation3], 128, 128, 8
    $region13: #{it_feedforward_forward.1} parent=1 // pred_fallthru
      _
    // Predicated region
    $region14: #{it_feedforward_forward.1} parent=1 // pred_check
      _
    $region15: #{it_feedforward_forward.1} parent=1 // pred_check_branch
      %36 = sbr.rel (0) target = $region17
    $region16: #{it_feedforward_forward.1} parent=1 // pred_region
      _
    $region17: #{it_feedforward_forward.1} parent=1 // pred_fallthru
      _
    // Predicated region
    $region18: #{it_feedforward_forward.1} parent=1 // pred_check
      _
    $region19: #{it_feedforward_forward.1} parent=1 // pred_check_branch
      %38 = sbr.rel (0) target = $region21
    $region20: #{it_feedforward_forward.1} parent=1 // pred_region
      _
    $region21: #{it_feedforward_forward.1} parent=1 // pred_fallthru
      _
    // Predicated region
    $region22: #{it_feedforward_forward.1} parent=1 // pred_check
      _
    $region23: #{it_feedforward_forward.1} parent=1 // pred_check_branch
      %40 = sbr.rel (0) target = $region25
    $region24: #{it_feedforward_forward.1} parent=1 // pred_region
      _
    $region25: #{it_feedforward_forward.1} parent=1 // pred_fallthru
      _
    // Predicated region
    $region26: #{it_feedforward_forward.1} parent=1 // pred_check
      _
    $region27: #{it_feedforward_forward.1} parent=1 // pred_check_branch
      %42 = sbr.rel (0) target = $region29
    $region28: #{it_feedforward_forward.1} parent=1 // pred_region
      %s44 = ssub.s32 2048, 2048
      %45 = vsyncadd [#allocation6], %s44
      %s46 = sshll.u32 [#allocation5], 4
      %s47 = int_to_ptr.vmem [resolvable:$true] %s46
      %52 = dma.hbm_to_vmem [thread:$0]  %s6, 2048, %s47, [#allocation6], 128, 128, 8
    $region29: #{it_feedforward_forward.1} parent=1 // pred_fallthru
      _
    // Predicated region
    $region30: #{it_feedforward_forward.1} parent=1 // pred_check
      _
    $region31: #{it_feedforward_forward.1} parent=1 // pred_check_branch
      %54 = sbr.rel (0) target = $region33
    $region32: #{it_feedforward_forward.1} parent=1 // pred_region
      %s56 = ssub.s32 2048, 2048
      %57 = vsyncadd [#allocation6], %s56
      %s58 = sshll.u32 [#allocation7], 4
      %s59 = int_to_ptr.vmem [resolvable:$true] %s58
      %64 = dma.hbm_to_vmem [thread:$0]  %s7, 2048, %s59, [#allocation6], 128, 128, 8
    $region33: #{it_feedforward_forward.1} parent=1 // pred_fallthru
      _
    // Predicated region
    $region34: #{it_feedforward_forward.1} parent=1 // pred_check
      _
    $region35: #{it_feedforward_forward.1} parent=1 // pred_check_branch
      %66 = sbr.rel (0) target = $region37
    $region36: #{it_feedforward_forward.1} parent=1 // pred_region
      _
    $region37: #{it_feedforward_forward.1} parent=1 // pred_fallthru
      _
    // Predicated region
    $region38: #{it_feedforward_forward.1} parent=1 // pred_check
      _
    $region39: #{it_feedforward_forward.1} parent=1 // pred_check_branch
      %68 = sbr.rel (0) target = $region41
    $region40: #{it_feedforward_forward.1} parent=1 // pred_region
      _
    $region41: #{it_feedforward_forward.1} parent=1 // pred_fallthru
      _
    // Predicated region
    $region42: #{it_feedforward_forward.1} parent=1 // pred_check
      _
    $region43: #{it_feedforward_forward.1} parent=1 // pred_check_branch
      %70 = sbr.rel (0) target = $region45
    $region44: #{it_feedforward_forward.1} parent=1 // pred_region
      _
    $region45: #{it_feedforward_forward.1} parent=1 // pred_fallthru
      _
    // Predicated region
    $region46: #{it_feedforward_forward.1} parent=1 // pred_check
      _
    $region47: #{it_feedforward_forward.1} parent=1 // pred_check_branch
      %72 = sbr.rel (0) target = $region49
    $region48: #{it_feedforward_forward.1} parent=1 // pred_region
      %73 = dma.done [#allocation3], 512
    $region49: #{it_feedforward_forward.1} parent=1 // pred_fallthru
      _
    // Predicated region
    $region50: #{it_feedforward_forward.1} parent=1 // pred_check
      _
    $region51: #{it_feedforward_forward.1} parent=1 // pred_check_branch
      %75 = sbr.rel (0) target = $region53
    $region52: #{it_feedforward_forward.1} parent=1 // pred_region
      %76 = dma.done [#allocation6], 2048
    $region53: #{it_feedforward_forward.1} parent=1 // pred_fallthru
      _
    // Predicated region
    $region54: #{it_feedforward_forward.1} parent=1 // pred_check
      _
    $region55: #{it_feedforward_forward.1} parent=1 // pred_check_branch
      %78 = sbr.rel (0) target = $region57
    $region56: #{it_feedforward_forward.1} parent=1 // pred_region
      %79 = dma.done [#allocation6], 2048
    $region57: #{it_feedforward_forward.1} parent=1 // pred_fallthru
      _
    %v80 = vld [vmem:[%s0] sm:$0xff]
    %v81 = vld [vmem:[%s0 + $0x8] sm:$0xff]
    %v82 = vrot.slane %v80, 4
    %v83 = vadd.f32 %v80, %v82
    %v84 = vrot.slane %v83, 2
    %v85 = vadd.f32 %v83, %v84
    %v86 = vrot.slane %v85, 1
    %v87 = vadd.f32 %v85, %v86
    %v88 = vrot.slane %v81, 4
    %v89 = vadd.f32 %v81, %v88
    %v90 = vrot.slane %v89, 2
    %v91 = vadd.f32 %v89, %v90
    %v92 = vrot.slane %v91, 1
    %v93 = vadd.f32 %v91, %v92
    %v94 = vmul.f32 %v87, 0.125
    %v95 = vmul.f32 %v93, 0.125
    %v96 = vld [vmem:[%s1] sm:$0x3]
    %v97 = vld [vmem:[#allocation2] sm:$0xff]
    %v98 = vld [vmem:[#allocation2 + $0x8] sm:$0xff]
    %v99 = vld [vmem:[#allocation2 + $0x10] sm:$0xff]
    %v100 = vld [vmem:[#allocation2 + $0x18] sm:$0xff]
    %v101 = vld [vmem:[%s3] sm:$0x1]
    %v103 = vlaneseq
    %v104 = vshrl.u32 %v103, 7
    %v105 = vsub.s32 0, %v104
    %v106 = vrot.slane %v101, %v105
    %vm108 = vcmask 261120
    %v110 = vsel %vm108, %v96, 0
    %112 = vmatprep.subr.mxu0 0.0
    %113 = vmatpush1.msra.mxu0 %v97
    %114 = vmatprep.subr.mxu0 0.0
    %115 = vmatpush1.msra.mxu0 %v98
    %116 = vmatprep.subr.mxu0 0.0
    %117 = vmatpush1.msra.mxu0 %v99
    %118 = vmatprep.subr.mxu0 0.0
    %119 = vmatpush1.msra.mxu0 %v100
    %120 = vmatprep.subr.mxu0 0.0
    %121 = vmatpush1.msra.mxu0 0.0
    %122 = vmatprep.subr.mxu0 0.0
    %123 = vmatpush1.msra.mxu0 0.0
    %124 = vmatprep.subr.mxu0 0.0
    %125 = vmatpush1.msra.mxu0 0.0
    %126 = vmatprep.subr.mxu0 0.0
    %127 = vmatpush1.msra.mxu0 0.0
    %128 = vmatprep.subr.mxu0 0.0
    %129 = vmatpush1.msra.mxu0 0.0
    %130 = vmatprep.subr.mxu0 0.0
    %131 = vmatpush1.msra.mxu0 0.0
    %132 = vmatprep.subr.mxu0 0.0
    %133 = vmatpush1.msra.mxu0 0.0
    %134 = vmatprep.subr.mxu0 0.0
    %135 = vmatpush1.msra.mxu0 0.0
    %136 = vmatprep.subr.mxu0 0.0
    %137 = vmatpush1.msra.mxu0 0.0
    %138 = vmatprep.subr.mxu0 0.0
    %139 = vmatpush1.msra.mxu0 0.0
    %140 = vmatprep.subr.mxu0 0.0
    %141 = vmatpush1.msra.mxu0 0.0
    %142 = vmatprep.subr.mxu0 0.0
    %143 = vmatpush1.msra.mxu0 0.0
    %144 = vmatprep.subr.mxu0 0.0
    %145 = vmatpush1.msra.mxu0 0.0
    %146 = vmatprep.subr.mxu0 0.0
    %147 = vmatpush1.msra.mxu0 0.0
    %148 = vmatprep.subr.mxu0 0.0
    %149 = vmatpush1.msra.mxu0 0.0
    %150 = vmatprep.subr.mxu0 0.0
    %151 = vmatpush1.msra.mxu0 0.0
    %152 = vmatprep.subr.mxu0 0.0
    %153 = vmatpush1.msra.mxu0 0.0
    %154 = vmatprep.subr.mxu0 0.0
    %155 = vmatpush1.msra.mxu0 0.0
    %156 = vmatprep.subr.mxu0 0.0
    %157 = vmatpush1.msra.mxu0 0.0
    %158 = vmatprep.subr.mxu0 0.0
    %159 = vmatpush1.msra.mxu0 0.0
    %160 = vmatprep.subr.mxu0 0.0
    %161 = vmatpush1.msra.mxu0 0.0
    %162 = vmatprep.subr.mxu0 0.0
    %163 = vmatpush1.msra.mxu0 0.0
    %164 = vmatprep.subr.mxu0 0.0
    %165 = vmatpush1.msra.mxu0 0.0
    %166 = vmatprep.subr.mxu0 0.0
    %167 = vmatpush1.msra.mxu0 0.0
    %168 = vmatprep.subr.mxu0 0.0
    %169 = vmatpush1.msra.mxu0 0.0
    %170 = vmatprep.subr.mxu0 0.0
    %171 = vmatpush1.msra.mxu0 0.0
    %172 = vmatprep.subr.mxu0 0.0
    %173 = vmatpush1.msra.mxu0 0.0
    %174 = vmatprep.subr.mxu0 0.0
    %175 = vmatpush1.msra.mxu0 0.0
    %176 = vmatprep.mubr.f32.mxu0 0.0
    %177 = vmatmul.mubr.f32.gmra.mrb[0].mxu0 %v110
    %v178 = vpop.f32.mrb[0].mxu0
    %v179 = vadd.f32 %v106, %v178
    %v180 = vpop.f32.mrb[0].mxu0
    %181 = vdwg.mxu0
    %v182 = vmax.f32 %v179, 0.0
    %v183 = vld [vmem:[%s4] sm:$0xff]
    %v184 = vld [vmem:[%s4 + $0x8] sm:$0xff]
    %v185 = vld [vmem:[%s4 + $0x10] sm:$0xff]
    %v186 = vld [vmem:[%s4 + $0x18] sm:$0xff]
    %v187 = vld [vmem:[%s4 + $0x20] sm:$0xff]
    %v188 = vld [vmem:[%s4 + $0x28] sm:$0xff]
    %v189 = vld [vmem:[%s4 + $0x30] sm:$0xff]
    %v190 = vld [vmem:[%s4 + $0x38] sm:$0xff]
    %v191 = vld [vmem:[%s4 + $0x40] sm:$0xff]
    %v192 = vld [vmem:[%s4 + $0x48] sm:$0xff]
    %v193 = vld [vmem:[%s4 + $0x50] sm:$0xff]
    %v194 = vld [vmem:[%s4 + $0x58] sm:$0xff]
    %v195 = vld [vmem:[%s4 + $0x60] sm:$0xff]
    %v196 = vld [vmem:[%s4 + $0x68] sm:$0xff]
    %v197 = vld [vmem:[%s4 + $0x70] sm:$0xff]
    %v198 = vld [vmem:[%s4 + $0x78] sm:$0xff]
    %v199 = vld [vmem:[%s5] sm:$0x1]
    %v201 = vlaneseq
    %v202 = vshrl.u32 %v201, 7
    %v203 = vsub.s32 0, %v202
    %v204 = vrot.slane %v199, %v203
    %206 = vmatprep.subr.mxu0 0.0
    %207 = vmatpush1.msra.mxu0 %v183
    %208 = vmatprep.subr.mxu0 0.0
    %209 = vmatpush1.msra.mxu0 %v184
    %210 = vmatprep.subr.mxu0 0.0
    %211 = vmatpush1.msra.mxu0 %v185
    %212 = vmatprep.subr.mxu0 0.0
    %213 = vmatpush1.msra.mxu0 %v186
    %214 = vmatprep.subr.mxu0 0.0
    %215 = vmatpush1.msra.mxu0 %v187
    %216 = vmatprep.subr.mxu0 0.0
    %217 = vmatpush1.msra.mxu0 %v188
    %218 = vmatprep.subr.mxu0 0.0
    %219 = vmatpush1.msra.mxu0 %v189
    %220 = vmatprep.subr.mxu0 0.0
    %221 = vmatpush1.msra.mxu0 %v190
    %222 = vmatprep.subr.mxu0 0.0
    %223 = vmatpush1.msra.mxu0 %v191
    %224 = vmatprep.subr.mxu0 0.0
    %225 = vmatpush1.msra.mxu0 %v192
    %226 = vmatprep.subr.mxu0 0.0
    %227 = vmatpush1.msra.mxu0 %v193
    %228 = vmatprep.subr.mxu0 0.0
    %229 = vmatpush1.msra.mxu0 %v194
    %230 = vmatprep.subr.mxu0 0.0
    %231 = vmatpush1.msra.mxu0 %v195
    %232 = vmatprep.subr.mxu0 0.0
    %233 = vmatpush1.msra.mxu0 %v196
    %234 = vmatprep.subr.mxu0 0.0
    %235 = vmatpush1.msra.mxu0 %v197
    %236 = vmatprep.subr.mxu0 0.0
    %237 = vmatpush1.msra.mxu0 %v198
    %238 = vmatprep.subr.mxu0 0.0
    %239 = vmatpush1.msra.mxu0 0.0
    %240 = vmatprep.subr.mxu0 0.0
    %241 = vmatpush1.msra.mxu0 0.0
    %242 = vmatprep.subr.mxu0 0.0
    %243 = vmatpush1.msra.mxu0 0.0
    %244 = vmatprep.subr.mxu0 0.0
    %245 = vmatpush1.msra.mxu0 0.0
    %246 = vmatprep.subr.mxu0 0.0
    %247 = vmatpush1.msra.mxu0 0.0
    %248 = vmatprep.subr.mxu0 0.0
    %249 = vmatpush1.msra.mxu0 0.0
    %250 = vmatprep.subr.mxu0 0.0
    %251 = vmatpush1.msra.mxu0 0.0
    %252 = vmatprep.subr.mxu0 0.0
    %253 = vmatpush1.msra.mxu0 0.0
    %254 = vmatprep.subr.mxu0 0.0
    %255 = vmatpush1.msra.mxu0 0.0
    %256 = vmatprep.subr.mxu0 0.0
    %257 = vmatpush1.msra.mxu0 0.0
    %258 = vmatprep.subr.mxu0 0.0
    %259 = vmatpush1.msra.mxu0 0.0
    %260 = vmatprep.subr.mxu0 0.0
    %261 = vmatpush1.msra.mxu0 0.0
    %262 = vmatprep.subr.mxu0 0.0
    %263 = vmatpush1.msra.mxu0 0.0
    %264 = vmatprep.subr.mxu0 0.0
    %265 = vmatpush1.msra.mxu0 0.0
    %266 = vmatprep.subr.mxu0 0.0
    %267 = vmatpush1.msra.mxu0 0.0
    %268 = vmatprep.subr.mxu0 0.0
    %269 = vmatpush1.msra.mxu0 0.0
    %270 = vmatprep.mubr.f32.mxu0 0.0
    %271 = vmatmul.mubr.f32.gmra.mrb[0].mxu0 %v182
    %v272 = vpop.f32.mrb[0].mxu0
    %v273 = vadd.f32 %v204, %v272
    %v274 = vpop.f32.mrb[0].mxu0
    %275 = vdwg.mxu0
    %v276 = vld [vmem:[#allocation5] sm:$0xff]
    %v277 = vld [vmem:[#allocation5 + $0x8] sm:$0xff]
    %v278 = vld [vmem:[#allocation5 + $0x10] sm:$0xff]
    %v279 = vld [vmem:[#allocation5 + $0x18] sm:$0xff]
    %v280 = vld [vmem:[#allocation5 + $0x20] sm:$0xff]
    %v281 = vld [vmem:[#allocation5 + $0x28] sm:$0xff]
    %v282 = vld [vmem:[#allocation5 + $0x30] sm:$0xff]
    %v283 = vld [vmem:[#allocation5 + $0x38] sm:$0xff]
    %v284 = vld [vmem:[#allocation5 + $0x40] sm:$0xff]
    %v285 = vld [vmem:[#allocation5 + $0x48] sm:$0xff]
    %v286 = vld [vmem:[#allocation5 + $0x50] sm:$0xff]
    %v287 = vld [vmem:[#allocation5 + $0x58] sm:$0xff]
    %v288 = vld [vmem:[#allocation5 + $0x60] sm:$0xff]
    %v289 = vld [vmem:[#allocation5 + $0x68] sm:$0xff]
    %v290 = vld [vmem:[#allocation5 + $0x70] sm:$0xff]
    %v291 = vld [vmem:[#allocation5 + $0x78] sm:$0xff]
    %v292 = vld [vmem:[#allocation7] sm:$0xff]
    %v293 = vld [vmem:[#allocation7 + $0x8] sm:$0xff]
    %v294 = vld [vmem:[#allocation7 + $0x10] sm:$0xff]
    %v295 = vld [vmem:[#allocation7 + $0x18] sm:$0xff]
    %v296 = vld [vmem:[#allocation7 + $0x20] sm:$0xff]
    %v297 = vld [vmem:[#allocation7 + $0x28] sm:$0xff]
    %v298 = vld [vmem:[#allocation7 + $0x30] sm:$0xff]
    %v299 = vld [vmem:[#allocation7 + $0x38] sm:$0xff]
    %v300 = vld [vmem:[#allocation7 + $0x40] sm:$0xff]
    %v301 = vld [vmem:[#allocation7 + $0x48] sm:$0xff]
    %v302 = vld [vmem:[#allocation7 + $0x50] sm:$0xff]
    %v303 = vld [vmem:[#allocation7 + $0x58] sm:$0xff]
    %v304 = vld [vmem:[#allocation7 + $0x60] sm:$0xff]
    %v305 = vld [vmem:[#allocation7 + $0x68] sm:$0xff]
    %v306 = vld [vmem:[#allocation7 + $0x70] sm:$0xff]
    %v307 = vld [vmem:[#allocation7 + $0x78] sm:$0xff]
    %308 = vmatprep.subr.mxu0 0.0
    %309 = vmatpush1.msra.mxu0 %v292
    %310 = vmatprep.subr.mxu0 0.0
    %311 = vmatpush1.msra.mxu0 %v293
    %312 = vmatprep.subr.mxu0 0.0
    %313 = vmatpush1.msra.mxu0 %v294
    %314 = vmatprep.subr.mxu0 0.0
    %315 = vmatpush1.msra.mxu0 %v295
    %316 = vmatprep.subr.mxu0 0.0
    %317 = vmatpush1.msra.mxu0 %v296
    %318 = vmatprep.subr.mxu0 0.0
    %319 = vmatpush1.msra.mxu0 %v297
    %320 = vmatprep.subr.mxu0 0.0
    %321 = vmatpush1.msra.mxu0 %v298
    %322 = vmatprep.subr.mxu0 0.0
    %323 = vmatpush1.msra.mxu0 %v299
    %324 = vmatprep.subr.mxu0 0.0
    %325 = vmatpush1.msra.mxu0 %v300
    %326 = vmatprep.subr.mxu0 0.0
    %327 = vmatpush1.msra.mxu0 %v301
    %328 = vmatprep.subr.mxu0 0.0
    %329 = vmatpush1.msra.mxu0 %v302
    %330 = vmatprep.subr.mxu0 0.0
    %331 = vmatpush1.msra.mxu0 %v303
    %332 = vmatprep.subr.mxu0 0.0
    %333 = vmatpush1.msra.mxu0 %v304
    %334 = vmatprep.subr.mxu0 0.0
    %335 = vmatpush1.msra.mxu0 %v305
    %336 = vmatprep.subr.mxu0 0.0
    %337 = vmatpush1.msra.mxu0 %v306
    %338 = vmatprep.subr.mxu0 0.0
    %339 = vmatpush1.msra.mxu0 %v307
    %340 = vmatprep.subr.mxu0 0.0
    %341 = vmatpush1.msra.mxu0 0.0
    %342 = vmatprep.subr.mxu0 0.0
    %343 = vmatpush1.msra.mxu0 0.0
    %344 = vmatprep.subr.mxu0 0.0
    %345 = vmatpush1.msra.mxu0 0.0
    %346 = vmatprep.subr.mxu0 0.0
    %347 = vmatpush1.msra.mxu0 0.0
    %348 = vmatprep.subr.mxu0 0.0
    %349 = vmatpush1.msra.mxu0 0.0
    %350 = vmatprep.subr.mxu0 0.0
    %351 = vmatpush1.msra.mxu0 0.0
    %352 = vmatprep.subr.mxu0 0.0
    %353 = vmatpush1.msra.mxu0 0.0
    %354 = vmatprep.subr.mxu0 0.0
    %355 = vmatpush1.msra.mxu0 0.0
    %356 = vmatprep.subr.mxu0 0.0
    %357 = vmatpush1.msra.mxu0 0.0
    %358 = vmatprep.subr.mxu0 0.0
    %359 = vmatpush1.msra.mxu0 0.0
    %360 = vmatprep.subr.mxu0 0.0
    %361 = vmatpush1.msra.mxu0 0.0
    %362 = vmatprep.subr.mxu0 0.0
    %363 = vmatpush1.msra.mxu0 0.0
    %364 = vmatprep.subr.mxu0 0.0
    %365 = vmatpush1.msra.mxu0 0.0
    %366 = vmatprep.subr.mxu0 0.0
    %367 = vmatpush1.msra.mxu0 0.0
    %368 = vmatprep.subr.mxu0 0.0
    %369 = vmatpush1.msra.mxu0 0.0
    %370 = vmatprep.subr.mxu0 0.0
    %371 = vmatpush1.msra.mxu0 0.0
    %372 = vmatprep.mubr.f32.mxu0 0.0
    %373 = vmatmul.mubr.f32.gmra.mrb[0].mxu0 %v273
    %v374 = vpop.f32.mrb[0].mxu0
    %v375 = vadd.f32 0.0, %v374
    %v376 = vpop.f32.mrb[0].mxu0
    %377 = vdwg.mxu0
    %vm380 = vcmask 1041409
    %v381 = vsel %vm380, %v95, %v94
    %383 = vmatprep.subr.mxu0 0.0
    %384 = vmatpush1.msra.mxu0 %v276
    %385 = vmatprep.subr.mxu0 0.0
    %386 = vmatpush1.msra.mxu0 %v277
    %387 = vmatprep.subr.mxu0 0.0
    %388 = vmatpush1.msra.mxu0 %v278
    %389 = vmatprep.subr.mxu0 0.0
    %390 = vmatpush1.msra.mxu0 %v279
    %391 = vmatprep.subr.mxu0 0.0
    %392 = vmatpush1.msra.mxu0 %v280
    %393 = vmatprep.subr.mxu0 0.0
    %394 = vmatpush1.msra.mxu0 %v281
    %395 = vmatprep.subr.mxu0 0.0
    %396 = vmatpush1.msra.mxu0 %v282
    %397 = vmatprep.subr.mxu0 0.0
    %398 = vmatpush1.msra.mxu0 %v283
    %399 = vmatprep.subr.mxu0 0.0
    %400 = vmatpush1.msra.mxu0 %v284
    %401 = vmatprep.subr.mxu0 0.0
    %402 = vmatpush1.msra.mxu0 %v285
    %403 = vmatprep.subr.mxu0 0.0
    %404 = vmatpush1.msra.mxu0 %v286
    %405 = vmatprep.subr.mxu0 0.0
    %406 = vmatpush1.msra.mxu0 %v287
    %407 = vmatprep.subr.mxu0 0.0
    %408 = vmatpush1.msra.mxu0 %v288
    %409 = vmatprep.subr.mxu0 0.0
    %410 = vmatpush1.msra.mxu0 %v289
    %411 = vmatprep.subr.mxu0 0.0
    %412 = vmatpush1.msra.mxu0 %v290
    %413 = vmatprep.subr.mxu0 0.0
    %414 = vmatpush1.msra.mxu0 %v291
    %415 = vmatprep.subr.mxu0 0.0
    %416 = vmatpush1.msra.mxu0 0.0
    %417 = vmatprep.subr.mxu0 0.0
    %418 = vmatpush1.msra.mxu0 0.0
    %419 = vmatprep.subr.mxu0 0.0
    %420 = vmatpush1.msra.mxu0 0.0
    %421 = vmatprep.subr.mxu0 0.0
    %422 = vmatpush1.msra.mxu0 0.0
    %423 = vmatprep.subr.mxu0 0.0
    %424 = vmatpush1.msra.mxu0 0.0
    %425 = vmatprep.subr.mxu0 0.0
    %426 = vmatpush1.msra.mxu0 0.0
    %427 = vmatprep.subr.mxu0 0.0
    %428 = vmatpush1.msra.mxu0 0.0
    %429 = vmatprep.subr.mxu0 0.0
    %430 = vmatpush1.msra.mxu0 0.0
    %431 = vmatprep.subr.mxu0 0.0
    %432 = vmatpush1.msra.mxu0 0.0
    %433 = vmatprep.subr.mxu0 0.0
    %434 = vmatpush1.msra.mxu0 0.0
    %435 = vmatprep.subr.mxu0 0.0
    %436 = vmatpush1.msra.mxu0 0.0
    %437 = vmatprep.subr.mxu0 0.0
    %438 = vmatpush1.msra.mxu0 0.0
    %439 = vmatprep.subr.mxu0 0.0
    %440 = vmatpush1.msra.mxu0 0.0
    %441 = vmatprep.subr.mxu0 0.0
    %442 = vmatpush1.msra.mxu0 0.0
    %443 = vmatprep.subr.mxu0 0.0
    %444 = vmatpush1.msra.mxu0 0.0
    %445 = vmatprep.subr.mxu0 0.0
    %446 = vmatpush1.msra.mxu0 0.0
    %447 = vmatprep.mubr.f32.mxu0 0.0
    %448 = vmatmul.mubr.f32.gmra.mrb[0].mxu0 %v381
    %v449 = vpop.f32.mrb[0].mxu0
    %v450 = vadd.f32 %v375, %v449
    %v451 = vpop.f32.mrb[0].mxu0
    %452 = vdwg.mxu0
    %v453 = vld [vmem:[%s8] sm:$0x1]
    %v455 = vlaneseq
    %v456 = vshrl.u32 %v455, 7
    %v457 = vsub.s32 0, %v456
    %v458 = vrot.slane %v453, %v457
    %v460 = vadd.f32 %v450, %v458
    %v461 = vmax.f32 %v460, 0.0
    %v462 = vld [vmem:[%s9] sm:$0xff]
    %v463 = vld [vmem:[%s9 + $0x8] sm:$0xff]
    %v464 = vld [vmem:[%s9 + $0x10] sm:$0xff]
    %v465 = vld [vmem:[%s9 + $0x18] sm:$0xff]
    %v466 = vld [vmem:[%s9 + $0x20] sm:$0xff]
    %v467 = vld [vmem:[%s9 + $0x28] sm:$0xff]
    %v468 = vld [vmem:[%s9 + $0x30] sm:$0xff]
    %v469 = vld [vmem:[%s9 + $0x38] sm:$0xff]
    %v470 = vld [vmem:[%s9 + $0x40] sm:$0xff]
    %v471 = vld [vmem:[%s9 + $0x48] sm:$0xff]
    %v472 = vld [vmem:[%s9 + $0x50] sm:$0xff]
    %v473 = vld [vmem:[%s9 + $0x58] sm:$0xff]
    %v474 = vld [vmem:[%s9 + $0x60] sm:$0xff]
    %v475 = vld [vmem:[%s9 + $0x68] sm:$0xff]
    %v476 = vld [vmem:[%s9 + $0x70] sm:$0xff]
    %v477 = vld [vmem:[%s9 + $0x78] sm:$0xff]
    %v478 = vld [vmem:[%s10] sm:$0x1]
    %v480 = vlaneseq
    %v481 = vshrl.u32 %v480, 7
    %v482 = vsub.s32 0, %v481
    %v483 = vrot.slane %v478, %v482
    %485 = vmatprep.subr.mxu0 0.0
    %486 = vmatpush1.msra.mxu0 %v462
    %487 = vmatprep.subr.mxu0 0.0
    %488 = vmatpush1.msra.mxu0 %v463
    %489 = vmatprep.subr.mxu0 0.0
    %490 = vmatpush1.msra.mxu0 %v464
    %491 = vmatprep.subr.mxu0 0.0
    %492 = vmatpush1.msra.mxu0 %v465
    %493 = vmatprep.subr.mxu0 0.0
    %494 = vmatpush1.msra.mxu0 %v466
    %495 = vmatprep.subr.mxu0 0.0
    %496 = vmatpush1.msra.mxu0 %v467
    %497 = vmatprep.subr.mxu0 0.0
    %498 = vmatpush1.msra.mxu0 %v468
    %499 = vmatprep.subr.mxu0 0.0
    %500 = vmatpush1.msra.mxu0 %v469
    %501 = vmatprep.subr.mxu0 0.0
    %502 = vmatpush1.msra.mxu0 %v470
    %503 = vmatprep.subr.mxu0 0.0
    %504 = vmatpush1.msra.mxu0 %v471
    %505 = vmatprep.subr.mxu0 0.0
    %506 = vmatpush1.msra.mxu0 %v472
    %507 = vmatprep.subr.mxu0 0.0
    %508 = vmatpush1.msra.mxu0 %v473
    %509 = vmatprep.subr.mxu0 0.0
    %510 = vmatpush1.msra.mxu0 %v474
    %511 = vmatprep.subr.mxu0 0.0
    %512 = vmatpush1.msra.mxu0 %v475
    %513 = vmatprep.subr.mxu0 0.0
    %514 = vmatpush1.msra.mxu0 %v476
    %515 = vmatprep.subr.mxu0 0.0
    %516 = vmatpush1.msra.mxu0 %v477
    %517 = vmatprep.subr.mxu0 0.0
    %518 = vmatpush1.msra.mxu0 0.0
    %519 = vmatprep.subr.mxu0 0.0
    %520 = vmatpush1.msra.mxu0 0.0
    %521 = vmatprep.subr.mxu0 0.0
    %522 = vmatpush1.msra.mxu0 0.0
    %523 = vmatprep.subr.mxu0 0.0
    %524 = vmatpush1.msra.mxu0 0.0
    %525 = vmatprep.subr.mxu0 0.0
    %526 = vmatpush1.msra.mxu0 0.0
    %527 = vmatprep.subr.mxu0 0.0
    %528 = vmatpush1.msra.mxu0 0.0
    %529 = vmatprep.subr.mxu0 0.0
    %530 = vmatpush1.msra.mxu0 0.0
    %531 = vmatprep.subr.mxu0 0.0
    %532 = vmatpush1.msra.mxu0 0.0
    %533 = vmatprep.subr.mxu0 0.0
    %534 = vmatpush1.msra.mxu0 0.0
    %535 = vmatprep.subr.mxu0 0.0
    %536 = vmatpush1.msra.mxu0 0.0
    %537 = vmatprep.subr.mxu0 0.0
    %538 = vmatpush1.msra.mxu0 0.0
    %539 = vmatprep.subr.mxu0 0.0
    %540 = vmatpush1.msra.mxu0 0.0
    %541 = vmatprep.subr.mxu0 0.0
    %542 = vmatpush1.msra.mxu0 0.0
    %543 = vmatprep.subr.mxu0 0.0
    %544 = vmatpush1.msra.mxu0 0.0
    %545 = vmatprep.subr.mxu0 0.0
    %546 = vmatpush1.msra.mxu0 0.0
    %547 = vmatprep.subr.mxu0 0.0
    %548 = vmatpush1.msra.mxu0 0.0
    %549 = vmatprep.mubr.f32.mxu0 0.0
    %550 = vmatmul.mubr.f32.gmra.mrb[0].mxu0 %v461
    %v551 = vpop.f32.mrb[0].mxu0
    %v552 = vadd.f32 %v483, %v551
    %v553 = vpop.f32.mrb[0].mxu0
    %554 = vdwg.mxu0
    %v555 = vxor.u32 %v552, 2147483648
    %v556 = vmul.f32 %v555, 1.442695
    %v557 = vpow.pop %v556
    %v558 = vadd.f32 %v557, 1.0
    %v559 = vrcp.pop %v558
    %v560 = vmul.f32 1.0, %v559
    %v561 = vlaneseq
    %v562 = vshrl.u32 %v561, 7
    %v563 = vsub.s32 0, %v562
    %v564 = vrot.slane %v560, %v563
    %566 = vbcast.lane.b32.xlu0 %v564, 256
    %v567 = vpop.permute.xlu0 %566
    %v568 = vlaneseq
    %v569 = vshrl.u32 %v568, 7
    %v570 = vsub.s32 1, %v569
    %v571 = vrot.slane %v560, %v570
    %573 = vbcast.lane.b32.xlu0 %v571, 256
    %v574 = vpop.permute.xlu0 %573
    %v575 = vlaneseq
    %v576 = vshrl.u32 %v575, 7
    %v577 = vsub.s32 0, %v576
    %v578 = vrot.slane %v552, %v577
    %s580 = sor.u32 256, 8
    %581 = vbcast.lane.b32.xlu0 %v578, %s580
    %v582 = vpop.permute.xlu0 %581
    %v583 = vlaneseq
    %v584 = vshrl.u32 %v583, 7
    %v585 = vsub.s32 1, %v584
    %v586 = vrot.slane %v552, %v585
    %s588 = sor.u32 256, 8
    %589 = vbcast.lane.b32.xlu0 %v586, %s588
    %v590 = vpop.permute.xlu0 %589
    %v593 = vunpack.c.l.s4 1966171168
    %v594 = vunpack.c.0.s8 %v593
    %v595 = vlaneseq
    %v596 = vshrl.u32 %v595, 7
    %v597 = vsub.s32 %v594, %v596
    %v598 = vrot.slane %v273, %v597
    %v599 = vcombine.high %v598, %v598
    %v601 = vunpack.c.l.s4 1966171168
    %v602 = vunpack.c.0.s8 %v601
    %v603 = vlaneseq
    %v604 = vshrl.u32 %v603, 7
    %v605 = vsub.s32 %v602, %v604
    %v606 = vrot.slane %v598, %v605
    %v608 = vunpack.c.l.s4 1966171168
    %v609 = vunpack.c.0.s8 %v608
    %v610 = vlaneseq
    %v611 = vshrl.u32 %v610, 7
    %v612 = vsub.s32 %v609, %v611
    %v613 = vrot.slane %v599, %v612
    %v614 = vlaneseq
    %v615 = vshrl.u32 %v614, 7
    %v616 = vsub.s32 0, %v615
    %v617 = vrot.slane %v606, %v616
    %v618 = vlaneseq
    %v619 = vshrl.u32 %v618, 7
    %v620 = vsub.s32 0, %v619
    %v621 = vrot.slane %v613, %v620
    %v624 = vadd.f32 %v617, %v582
    %v625 = vadd.f32 %v621, %v590
    %v626 = vsub.f32 %v80, %v617
    %v627 = vsub.f32 %v81, %v621
    %v628 = vmul.f32 %v567, %v626
    %v629 = vmul.f32 %v574, %v627
    %v630 = vadd.f32 %v628, %v624
    %v631 = vadd.f32 %v629, %v625
    %632 = vst [vmem:[#allocation8] sm:$0xff] %v630
    %633 = vst [vmem:[#allocation8 + $0x8] sm:$0xff] %v631
    // Predicated region
    $region58: #{it_feedforward_forward.1} parent=1 // pred_check
      _
    $region59: #{it_feedforward_forward.1} parent=1 // pred_check_branch
      %635 = sbr.rel (0) target = $region61
    $region60: #{it_feedforward_forward.1} parent=1 // pred_region
      %s637 = ssub.s32 256, 256
      %638 = vsyncadd [#allocation4], %s637
      %s639 = sshll.u32 [#allocation8], 4
      %s640 = int_to_ptr.vmem [resolvable:$true] %s639
      %645 = dma.vmem_to_hbm [thread:$0]  %s640, 256, %s11, [#allocation4], 128, 128, 8
    $region61: #{it_feedforward_forward.1} parent=1 // pred_fallthru
      _
    // Predicated region
    $region62: #{it_feedforward_forward.1} parent=1 // pred_check
      _
    $region63: #{it_feedforward_forward.1} parent=1 // pred_check_branch
      %647 = sbr.rel (0) target = $region65
    $region64: #{it_feedforward_forward.1} parent=1 // pred_region
      %648 = dma.done [#allocation4], 256
    $region65: #{it_feedforward_forward.1} parent=1 // pred_fallthru
      _
    %649 = vsyncpa [#allocation3], 1
    %650 = vsyncpa [#allocation6], 1
    %651 = vsyncpa [#allocation4], 1

</llo_original>
